<compile_context>
chip_gen: v5e
topology: v5e:2x2
jax: 0.10.0
libtpu: 0.0.40
codegen_flags: <defaults>
</compile_context>

<pallas_src>
from functools import partial

import numpy as np
import jax
import jax.numpy as jnp
from jax.experimental import pallas as pl
from jax.experimental.pallas import tpu as pltpu


# --------------------------------------------------------------------------
# Kernel: one MXU dot + bias + clip, single full-tile store.
# --------------------------------------------------------------------------
def _fused_kernel(x_ref, w_ref, b_ref, o_ref):
    # x_ref: (N, K)   activations, K = C*H
    # w_ref: (K, J)   fused conv+pad+linear weight, pre-scaled by 1/6
    # b_ref: (1, J)   fused bias, pre-scaled by 1/6 and shifted by +0.5
    # o_ref: (N, J)   flattened output (lane-dense, J = Cout*Hp*F)
    acc = jnp.dot(x_ref[...], w_ref[...], preferred_element_type=jnp.float32)
    o_ref[...] = jnp.clip(acc + b_ref[...], 0.0, 1.0).astype(o_ref.dtype)


# --------------------------------------------------------------------------
# One-time (init-time) constant construction, pure numpy — NOT in the jit.
# --------------------------------------------------------------------------
def build_fused_params(conv_w, conv_b, lin_w, lin_b, H):
    """Fuse conv(1x1, pad=1) + Linear + hard-sigmoid affine into (w2, bias).

    Returns:
      w2s: (C*H, Cout*(H+2)*F) float32, already scaled by 1/6
      bs : (1,   Cout*(H+2)*F) float32, already scaled by 1/6 and +0.5
    """
    conv_w = np.asarray(conv_w, dtype=np.float32)
    conv_b = np.asarray(conv_b, dtype=np.float32)
    lin_w = np.asarray(lin_w, dtype=np.float32)
    lin_b = np.asarray(lin_b, dtype=np.float32)

    Cout, C = conv_w.shape[0], conv_w.shape[1]
    F, Wp = lin_w.shape
    assert Wp == 3, "Linear in_features must equal padded width (requires W == 1)"
    Hp = H + 2
    K = C * H
    J = Cout * Hp * F

    wc = conv_w.reshape(Cout, C)            # 1x1 kernel -> (Cout, Cin)
    wmid = lin_w[:, 1]                      # center column (only one that sees data)

    # bias: linear bias + conv bias pushed through ALL linear columns
    bmat = lin_b[None, :] + conv_b[:, None] * lin_w.sum(axis=1)[None, :]   # (Cout, F)
    bflat = np.broadcast_to(bmat[:, None, :], (Cout, Hp, F)).reshape(1, J)

    # weight: W2[(ci,h),(co,hp,f)] = conv_w[co,ci] * lin_w[f,1] * (hp == h+1)
    wcomb = np.einsum("oc,f->cof", wc, wmid)                      # (C, Cout, F)
    sel = np.eye(H, Hp, k=1, dtype=np.float32)                    # (H, Hp): hp == h+1
    w2 = np.einsum("cof,hq->choqf", wcomb, sel).reshape(K, J)     # (C*H, Cout*Hp*F)

    # fold hard-sigmoid affine: clamp(z+3,0,6)/6 == clip(z/6 + 0.5, 0, 1)
    w2s = w2 * (1.0 / 6.0)
    bs = bflat * (1.0 / 6.0) + 0.5
    return jnp.asarray(w2s), jnp.asarray(bs)


# --------------------------------------------------------------------------
# Per-call forward: reshape + one pallas_call + reshape. Constants come in
# pre-fused, so nothing but the custom call runs on-device besides reshapes.
# --------------------------------------------------------------------------
@partial(jax.jit, static_argnames=("cout", "hp", "f"))
def model_forward(x, w2, b, *, cout, hp, f):
    N = x.shape[0]
    K, J = w2.shape
    x2 = x.reshape(N, K)                     # pure reshape (NCHW with W==1)

    out_flat = pl.pallas_call(
        _fused_kernel,
        out_shape=jax.ShapeDtypeStruct((N, J), jnp.float32),
        in_specs=[
            pl.BlockSpec(memory_space=pltpu.MemorySpace.VMEM),
            pl.BlockSpec(memory_space=pltpu.MemorySpace.VMEM),
            pl.BlockSpec(memory_space=pltpu.MemorySpace.VMEM),
        ],
        out_specs=pl.BlockSpec(memory_space=pltpu.MemorySpace.VMEM),
    )(x2, w2, b)

    return out_flat.reshape(N, cout, hp, f)


# --------------------------------------------------------------------------
# Pure-JAX reference mirroring the PyTorch forward.
# --------------------------------------------------------------------------
def _reference(x, conv_w, conv_b, lin_w, lin_b):
    x_pad = jnp.pad(x, ((0, 0), (0, 0), (1, 1), (1, 1)))
    wc = conv_w.reshape(conv_w.shape[0], conv_w.shape[1])
    conv_out = jnp.einsum("ck,nkhw->nchw", wc, x_pad) + conv_b[None, :, None, None]
    v1 = jnp.einsum("nchw,fw->nchf", conv_out, lin_w) + lin_b
    return jnp.clip(v1 + 3.0, 0.0, 6.0) / 6.0


if __name__ == "__main__":
    key = jax.random.PRNGKey(0)
    k_x, k_cw, k_cb, k_lw, k_lb = jax.random.split(key, 5)

    N, C, H, W = 2, 3, 16, 1          # W=1 so padded width == Linear in_features == 3
    Cout, F = 3, 4
    Hp = H + 2

    x = jax.random.normal(k_x, (N, C, H, W), dtype=jnp.float32)
    conv_w = jax.random.normal(k_cw, (Cout, C, 1, 1), dtype=jnp.float32) * 0.5
    conv_b = jax.random.normal(k_cb, (Cout,), dtype=jnp.float32) * 0.1
    lin_w = jax.random.normal(k_lw, (F, W + 2), dtype=jnp.float32) * 0.5
    lin_b = jax.random.normal(k_lb, (F,), dtype=jnp.float32) * 0.1

    # ---- init-time constant fusion (runs once, outside the jitted path) ----
    w2, bias = build_fused_params(conv_w, conv_b, lin_w, lin_b, H)

    out = model_forward(x, w2, bias, cout=Cout, hp=Hp, f=F)
    out = jax.block_until_ready(out)

    ref = _reference(x, conv_w, conv_b, lin_w, lin_b)
    assert out.shape == (N, Cout, Hp, F), out.shape
    assert jnp.allclose(out, ref, atol=1e-5, rtol=1e-5), "mismatch vs reference"

    print("KERNEL_OK")
</pallas_src>

<mosaic_0001>
module attributes {stable_mosaic.version = 11 : i64} {
  func.func @_fused_kernel(%arg0: memref<2x48xf32, #tpu.memory_space<vmem>>, %arg1: memref<48x216xf32, #tpu.memory_space<vmem>>, %arg2: memref<1x216xf32, #tpu.memory_space<vmem>>, %arg3: memref<2x216xf32, #tpu.memory_space<vmem>>) attributes {dimension_semantics = [], scalar_prefetch = 0 : i64, scratch_operands = 0 : i64, tpu.core_type = #tpu.core_type<tc>} {
    %c0 = arith.constant 0 : index
    %c0_0 = arith.constant 0 : index
    %0 = vector.load %arg0[%c0, %c0_0] : memref<2x48xf32, #tpu.memory_space<vmem>>, vector<2x48xf32>
    %c0_1 = arith.constant 0 : index
    %c0_2 = arith.constant 0 : index
    %1 = vector.load %arg1[%c0_1, %c0_2] : memref<48x216xf32, #tpu.memory_space<vmem>>, vector<48x216xf32>
    %cst = arith.constant dense<0.000000e+00> : vector<2x216xf32>
    %2 = tpu.matmul %0, %1, %cst {dimension_numbers = #tpu.dot_dimension_numbers<[1], [0], [0], [1], [0, 0, 1, 1], [], []>} : vector<2x48xf32>, vector<48x216xf32>, vector<2x216xf32> -> vector<2x216xf32>
    %c0_3 = arith.constant 0 : index
    %c0_4 = arith.constant 0 : index
    %3 = vector.load %arg2[%c0_3, %c0_4] : memref<1x216xf32, #tpu.memory_space<vmem>>, vector<1x216xf32>
    %4 = vector.broadcast %3 : vector<1x216xf32> to vector<2x216xf32>
    %5 = arith.addf %2, %4 : vector<2x216xf32>
    %cst_5 = arith.constant 0.000000e+00 : f32
    %cst_6 = arith.constant 1.000000e+00 : f32
    %6 = vector.broadcast %cst_5 : f32 to vector<2x216xf32>
    %7 = arith.maximumf %6, %5 : vector<2x216xf32>
    %8 = vector.broadcast %cst_6 : f32 to vector<2x216xf32>
    %9 = arith.minimumf %8, %7 : vector<2x216xf32>
    %c0_7 = arith.constant 0 : index
    %c0_8 = arith.constant 0 : index
    %10 = vector.load %arg3[%c0_7, %c0_8] : memref<2x216xf32, #tpu.memory_space<vmem>>, vector<2x216xf32>
    tpu.vector_store %arg3[%c0_7, %c0_8], %9 {strides = array<i32>} : memref<2x216xf32, #tpu.memory_space<vmem>>, vector<2x216xf32>,
    return
  }
}

</mosaic_0001>

<llo_original>
// kernel: model_forward.1
$region0: #{model_forward.1}
  #allocation0 [shape = 'u32[]', space=smem, size = 0x4, offset = 0x4, fixed_abs, tag = 'smem constant byte address 0x4 - core index']
  #allocation1 [shape = 'u32[72,128]{1,0:T(1,128)}', space=vmem, size = 0x9000, scoped, tag = 'internal scratch']
  %s0 = inlined_call_operand.vmem [shape: f32[2,48], index: 0, kind: input, shape index: {}]
  %s1 = inlined_call_operand.hbm [shape: f32[48,216], index: 1, kind: input, shape index: {}]
  %s2 = inlined_call_operand.vmem [shape: f32[1,216], index: 2, kind: input, shape index: {}]
  %s3 = inlined_call_operand.vmem [shape: f32[2,216], index: 3, kind: output, shape index: {}]
  %s4 = sld [smem:[#allocation0]]
  $region26: #{model_forward.1} parent=0
    _
  %s6 = ssub.s32 1, %s4
  %s7 = scalar_select 0, %s6, %s4
  $region1: #{model_forward.1} parent=0
    #allocation2 [shape = 'u8[49152]{0}', space=vmem, size = 0xc000, scoped, tag = 'input window, operand 1, single buffered']
    #allocation3 [shape = 's32[1]{0}', space=sflag, size = 0x4, scoped, tag = 'scoped memory for model_forward.1']
    %8 = vsyncpa [#allocation3], 0
    // Predicated region
    $region2: #{model_forward.1} parent=1 // pred_check
      _
    $region3: #{model_forward.1} parent=1 // pred_check_branch
      %10 = sbr.rel (0) target = $region5
    $region4: #{model_forward.1} parent=1 // pred_region
      _
    $region5: #{model_forward.1} parent=1 // pred_fallthru
      _
    // Predicated region
    $region6: #{model_forward.1} parent=1 // pred_check
      _
    $region7: #{model_forward.1} parent=1 // pred_check_branch
      %12 = sbr.rel (0) target = $region9
    $region8: #{model_forward.1} parent=1 // pred_region
      %14 = vsyncadd [#allocation3], 0
      %s15 = sshll.u32 %s1, 4
      %s16 = int_to_ptr.hbm [resolvable:$true] %s15
      %s17 = sshll.u32 [#allocation2], 4
      %s18 = int_to_ptr.vmem [resolvable:$true] %s17
      %23 = dma.hbm_to_vmem [thread:$0]  %s16, 1536, %s18, [#allocation3], 256, 256, 16
    $region9: #{model_forward.1} parent=1 // pred_fallthru
      _
    // Predicated region
    $region10: #{model_forward.1} parent=1 // pred_check
      _
    $region11: #{model_forward.1} parent=1 // pred_check_branch
      %25 = sbr.rel (0) target = $region13
    $region12: #{model_forward.1} parent=1 // pred_region
      _
    $region13: #{model_forward.1} parent=1 // pred_fallthru
      _
    // Predicated region
    $region14: #{model_forward.1} parent=1 // pred_check
      _
    $region15: #{model_forward.1} parent=1 // pred_check_branch
      %27 = sbr.rel (0) target = $region17
    $region16: #{model_forward.1} parent=1 // pred_region
      %29 = dma.done [#allocation3], 1536
    $region17: #{model_forward.1} parent=1 // pred_fallthru
      _
    %v30 = vld [vmem:[%s0] sm:$0x3]
    %v31 = vld [vmem:[#allocation2] sm:$0xff]
    %v32 = vld [vmem:[#allocation2 + $0x8] sm:$0xff]
    %v33 = vld [vmem:[#allocation2 + $0x10] sm:$0xff]
    %v34 = vld [vmem:[#allocation2 + $0x18] sm:$0xff]
    %v35 = vld [vmem:[#allocation2 + $0x20] sm:$0xff]
    %v36 = vld [vmem:[#allocation2 + $0x28] sm:$0xff]
    %v37 = vld [vmem:[#allocation2 + $0x30] sm:$0xff]
    %v38 = vld [vmem:[#allocation2 + $0x38] sm:$0xff]
    %v39 = vld [vmem:[#allocation2 + $0x40] sm:$0xff]
    %v40 = vld [vmem:[#allocation2 + $0x48] sm:$0xff]
    %v41 = vld [vmem:[#allocation2 + $0x50] sm:$0xff]
    %v42 = vld [vmem:[#allocation2 + $0x58] sm:$0xff]
    %v43 = vld [vmem:[%s2] sm:$0x3]
    %v45 = vperm.slane %v43, 0
    %v46 = vperm.slane %v43, 1
    %vm49 = vcmask 392192
    %v51 = vsel %vm49, %v30, 0
    %53 = vmatpush.msra.mxu0 0.0
    %54 = vmatpush.msra.mxu0 0.0
    %55 = vmatpush.msra.mxu0 0.0
    %56 = vmatpush.msra.mxu0 0.0
    %57 = vmatpush.msra.mxu0 0.0
    %58 = vmatpush.msra.mxu0 0.0
    %59 = vmatpush.msra.mxu0 0.0
    %60 = vmatpush.msra.mxu0 0.0
    %61 = vmatpush.msra.mxu0 0.0
    %62 = vmatpush.msra.mxu0 0.0
    %63 = vmatpush.msra.mxu0 %v41
    %64 = vmatpush.msra.mxu0 %v39
    %65 = vmatpush.msra.mxu0 %v37
    %66 = vmatpush.msra.mxu0 %v35
    %67 = vmatpush.msra.mxu0 %v33
    %68 = vmatpush.msra.mxu0 %v31
    %69 = vmatmul.f32.gmra.mxu0 %v51
    %v70 = vpop.f32.mrf.mxu0
    %v71 = vadd.f32 %v45, %v70
    %72 = vdwg.mxu0
    %73 = vmatpush.msra.mxu0 0.0
    %74 = vmatpush.msra.mxu0 0.0
    %75 = vmatpush.msra.mxu0 0.0
    %76 = vmatpush.msra.mxu0 0.0
    %77 = vmatpush.msra.mxu0 0.0
    %78 = vmatpush.msra.mxu0 0.0
    %79 = vmatpush.msra.mxu0 0.0
    %80 = vmatpush.msra.mxu0 0.0
    %81 = vmatpush.msra.mxu0 0.0
    %82 = vmatpush.msra.mxu0 0.0
    %83 = vmatpush.msra.mxu0 %v42
    %84 = vmatpush.msra.mxu0 %v40
    %85 = vmatpush.msra.mxu0 %v38
    %86 = vmatpush.msra.mxu0 %v36
    %87 = vmatpush.msra.mxu0 %v34
    %88 = vmatpush.msra.mxu0 %v32
    %89 = vmatmul.f32.gmra.mxu0 %v51
    %v90 = vpop.f32.mrf.mxu0
    %v91 = vadd.f32 %v46, %v90
    %92 = vdwg.mxu0
    %v93 = vmax.f32 %v71, 0.0
    %v94 = vmax.f32 %v91, 0.0
    %v95 = vmin.f32 %v93, 1.0
    %v96 = vmin.f32 %v94, 1.0
    %v99 = vrot.slane %v96, 6
    %vm100 = vcmask 1041408
    %v101 = vsel %vm100, %v95, %v99
    %vm103 = vcmask 715778
    %vm104 = vmor %vm103, %vm100
    %105 = vst.msk [vmem:[%s3] sm:$0xf] %vm104, %v101
    // Predicated region
    $region18: #{model_forward.1} parent=1 // pred_check
      _
    $region19: #{model_forward.1} parent=1 // pred_check_branch
      %107 = sbr.rel (0) target = $region21
    $region20: #{model_forward.1} parent=1 // pred_region
      _
    $region21: #{model_forward.1} parent=1 // pred_fallthru
      _
    // Predicated region
    $region22: #{model_forward.1} parent=1 // pred_check
      _
    $region23: #{model_forward.1} parent=1 // pred_check_branch
      %109 = sbr.rel (0) target = $region25
    $region24: #{model_forward.1} parent=1 // pred_region
      _
    $region25: #{model_forward.1} parent=1 // pred_fallthru
      _
    %110 = vsyncpa [#allocation3], 1

</llo_original>
